<compile_context>
chip_gen: v6e
topology: v6e:2x2x1
jax: 0.10.0
libtpu: 0.0.40
codegen_flags: <defaults>
</compile_context>

<pallas_src>
import jax
import jax.numpy as jnp
from jax import lax
from jax.experimental import pallas as pl
from jax.experimental.pallas import tpu as pltpu

# --- model config (matches MLP([1+D] + n_hidden*[dim_hidden] + [1])) ---------
D = 3              # spatial dims
N_HIDDEN = 2       # args.n_hidden
DIM_HIDDEN = 32    # args.dim_hidden
FEAT_IN = 1 + D    # |r|/h plus v_ij
FEAT_PAD = 8       # sublane-aligned feature count (zero-padded)
H = 1.5            # args.h (smoothing length)

VMEM_LIMIT = 48 * 1024 * 1024   # fits v7x (64 MiB) and overrides v5e's 16 MiB default


def _round_up(x, m):
    return ((x + m - 1) // m) * m


# -----------------------------------------------------------------------------
# Stage 1: per-edge teacher MLP (both +/- velocity branches), transposed output.
# -----------------------------------------------------------------------------
def _edge_mlp_kernel(xT_ref, w1t_ref, b1t_ref, w2t_ref, b2t_ref,
                     fposT_ref, fnegT_ref):
    xT = xT_ref[...]                                            # [FEAT_PAD, TE]

    # Sign column flips the velocity rows (1..D) for the -v_ij branch.
    row = lax.broadcasted_iota(jnp.int32, (FEAT_PAD, 1), 0)
    signT = jnp.where((row >= 1) & (row <= D), -1.0, 1.0).astype(jnp.float32)

    def mlp_T(x_t):
        h1 = jnp.dot(w1t_ref[...], x_t,
                     preferred_element_type=jnp.float32) + b1t_ref[...]
        h1 = h1 * jax.nn.sigmoid(h1)                            # SiLU (EUP)
        h2 = jnp.dot(w2t_ref[...], h1,
                     preferred_element_type=jnp.float32) + b2t_ref[...]
        return h2 * jax.nn.sigmoid(h2)                          # [Hdim, TE]

    fposT_ref[...] = mlp_T(xT)
    fnegT_ref[...] = mlp_T(xT * signT)


# -----------------------------------------------------------------------------
# Stage 2: scatter_mean over nodes via one-hot MXU matmul + deferred last layer.
# -----------------------------------------------------------------------------
def _scatter_mean_kernel(fposT_ref, fnegT_ref, ii_ref, jj_ref, w3t_ref, b3_ref,
                         out_ref, acc_i_ref, acc_j_ref, cnt_i_ref, cnt_j_ref):
    n_idx = pl.program_id(0)
    e_idx = pl.program_id(1)

    @pl.when(e_idx == 0)
    def _():
        acc_i_ref[...] = jnp.zeros_like(acc_i_ref)
        acc_j_ref[...] = jnp.zeros_like(acc_j_ref)
        cnt_i_ref[...] = jnp.zeros_like(cnt_i_ref)
        cnt_j_ref[...] = jnp.zeros_like(cnt_j_ref)

    te = fposT_ref.shape[1]
    tn = acc_i_ref.shape[1]

    # One-hot in [TE, TN] layout: lane iota over node ids, indices broadcast along
    # lanes.  Padded edges carry index -1 -> all-zero column -> no contribution.
    node_ids = n_idx * tn + lax.broadcasted_iota(jnp.int32, (te, tn), 1)
    oh_i = (node_ids == ii_ref[...]).astype(jnp.float32)        # [TE, TN]
    oh_j = (node_ids == jj_ref[...]).astype(jnp.float32)        # [TE, TN]

    # Segment sums: [Hdim, TE] x [TE, TN] -> lane-dense [Hdim, TN] accumulators.
    acc_i_ref[...] += jnp.dot(fposT_ref[...], oh_i, preferred_element_type=jnp.float32)
    acc_j_ref[...] += jnp.dot(fnegT_ref[...], oh_j, preferred_element_type=jnp.float32)

    # Per-node edge counts via tiny M=1 matmuls (no ones-column concat).
    ones_row = jnp.ones((1, te), jnp.float32)
    cnt_i_ref[...] += jnp.dot(ones_row, oh_i, preferred_element_type=jnp.float32)
    cnt_j_ref[...] += jnp.dot(ones_row, oh_j, preferred_element_type=jnp.float32)

    @pl.when(e_idx == pl.num_programs(1) - 1)
    def _():
        cnt_i = cnt_i_ref[...]
        cnt_j = cnt_j_ref[...]
        mean = (acc_i_ref[...] / jnp.maximum(cnt_i, 1.0)
                + acc_j_ref[...] / jnp.maximum(cnt_j, 1.0))      # [Hdim, TN]
        out_row = jnp.dot(w3t_ref[...], mean,
                          preferred_element_type=jnp.float32)    # [1, TN]
        # Deferred bias: nodes with no incident edge on a branch must stay exactly 0.
        bias = ((cnt_i > 0.0).astype(jnp.float32)
                + (cnt_j > 0.0).astype(jnp.float32)) * b3_ref[...]
        out_ref[...] = out_row + bias                            # lane-dense [1, TN]


# -----------------------------------------------------------------------------
# Wrapper reproducing CG_model_S_jit.forward semantics.
# -----------------------------------------------------------------------------
def cg_model_s_forward(inputs, params, h=H, edge_tile=2048, node_tile=256):
    edge_index = inputs["edge_index"]            # [2, E] int
    r_ij = inputs["r_ij"].astype(jnp.float32)    # [E, D]
    v = inputs["v"].astype(jnp.float32)          # [N, D]

    i = edge_index[0].astype(jnp.int32)
    j = edge_index[1].astype(jnp.int32)
    v_ij = v[i] - v[j]                                                   # [E, D]
    r_ = jnp.sqrt(jnp.sum(r_ij * r_ij, axis=-1, keepdims=True))          # [E, 1]
    x = jnp.concatenate([r_ / h, v_ij], axis=-1)                         # [E, 1+D]

    E = x.shape[0]
    N = v.shape[0]

    edge_tile = _round_up(edge_tile, 128)
    node_tile = _round_up(node_tile, 128)
    te = min(edge_tile, _round_up(E, 128))
    e_pad = _round_up(E, te)
    tn = min(node_tile, _round_up(N, 128))
    n_pad = _round_up(N, tn)

    # Pad edges (zero features, index -1 -> no contribution) and transpose features.
    x_pad = jnp.pad(x, ((0, e_pad - E), (0, FEAT_PAD - FEAT_IN)))
    xT = x_pad.T                                                         # [8, E_pad]
    ii_p = jnp.pad(i, (0, e_pad - E), constant_values=-1)[:, None]       # [E_pad, 1]
    jj_p = jnp.pad(j, (0, e_pad - E), constant_values=-1)[:, None]       # [E_pad, 1]

    w1, b1, w2, b2, w3, b3 = params
    hdim = w1.shape[1]
    w1t = jnp.pad(w1, ((0, FEAT_PAD - FEAT_IN), (0, 0))).T               # [Hdim, 8]
    b1t = b1.T                                                           # [Hdim, 1]
    w2t = w2.T                                                           # [Hdim, Hdim]
    b2t = b2.T                                                           # [Hdim, 1]
    w3t = w3.T                                                           # [1, Hdim]

    n_e_tiles = e_pad // te
    n_n_tiles = n_pad // tn
    const2 = lambda n, e: (0, 0)

    # ---- Stage 1: edge MLP (runs once per edge) -----------------------------
    featT_pos, featT_neg = pl.pallas_call(
        _edge_mlp_kernel,
        out_shape=(jax.ShapeDtypeStruct((hdim, e_pad), jnp.float32),
                   jax.ShapeDtypeStruct((hdim, e_pad), jnp.float32)),
        grid_spec=pltpu.PrefetchScalarGridSpec(
            num_scalar_prefetch=0,
            grid=(n_e_tiles,),
            in_specs=[
                pl.BlockSpec((FEAT_PAD, te), lambda e: (0, e)),          # x^T
                pl.BlockSpec((hdim, FEAT_PAD), lambda e: (0, 0)),        # w1^T
                pl.BlockSpec((hdim, 1), lambda e: (0, 0)),               # b1^T
                pl.BlockSpec((hdim, hdim), lambda e: (0, 0)),            # w2^T
                pl.BlockSpec((hdim, 1), lambda e: (0, 0)),               # b2^T
            ],
            out_specs=[pl.BlockSpec((hdim, te), lambda e: (0, e)),
                       pl.BlockSpec((hdim, te), lambda e: (0, e))],
        ),
        compiler_params=pltpu.CompilerParams(
            dimension_semantics=("parallel",),
            vmem_limit_bytes=VMEM_LIMIT,
        ),
    )(xT, w1t, b1t, w2t, b2t)

    # ---- Stage 2: scatter_mean + deferred last layer ------------------------
    out_row = pl.pallas_call(
        _scatter_mean_kernel,
        out_shape=jax.ShapeDtypeStruct((1, n_pad), jnp.float32),
        grid_spec=pltpu.PrefetchScalarGridSpec(
            num_scalar_prefetch=0,
            grid=(n_n_tiles, n_e_tiles),
            in_specs=[
                pl.BlockSpec((hdim, te), lambda n, e: (0, e)),           # h2^T (+v)
                pl.BlockSpec((hdim, te), lambda n, e: (0, e)),           # h2^T (-v)
                pl.BlockSpec((te, 1), lambda n, e: (e, 0)),              # i indices
                pl.BlockSpec((te, 1), lambda n, e: (e, 0)),              # j indices
                pl.BlockSpec((1, hdim), const2),                         # w3^T
                pl.BlockSpec((1, 1), const2),                            # b3
            ],
            out_specs=pl.BlockSpec((1, tn), lambda n, e: (0, n)),
            scratch_shapes=[pltpu.VMEM((hdim, tn), jnp.float32),         # acc_i
                            pltpu.VMEM((hdim, tn), jnp.float32),         # acc_j
                            pltpu.VMEM((1, tn), jnp.float32),            # cnt_i
                            pltpu.VMEM((1, tn), jnp.float32)],           # cnt_j
        ),
        compiler_params=pltpu.CompilerParams(
            dimension_semantics=("parallel", "arbitrary"),
            vmem_limit_bytes=VMEM_LIMIT,
        ),
    )(featT_pos, featT_neg, ii_p, jj_p, w3t, b3)

    return out_row.reshape(-1)[:N][:, None]


# -----------------------------------------------------------------------------
# Pure-JAX reference (mirrors the PyTorch module) and test harness.
# -----------------------------------------------------------------------------
def _reference_forward(inputs, params, h=H):
    w1, b1, w2, b2, w3, b3 = params
    edge_index = inputs["edge_index"]
    r_ij = inputs["r_ij"]
    v = inputs["v"]
    i = edge_index[0]
    j = edge_index[1]
    v_ij = v[i] - v[j]
    r_ = jnp.sqrt(jnp.sum(r_ij * r_ij, axis=-1, keepdims=True))

    def mlp(x):
        hdn = jax.nn.silu(x @ w1 + b1[0])
        hdn = jax.nn.silu(hdn @ w2 + b2[0])
        return hdn @ w3 + b3[0]

    phi_i = mlp(jnp.concatenate([r_ / h, v_ij], axis=-1))
    phi_j = mlp(jnp.concatenate([r_ / h, -v_ij], axis=-1))
    N = v.shape[0]

    def scatter_mean(vals, idx):
        s = jax.ops.segment_sum(vals, idx, num_segments=N)
        c = jax.ops.segment_sum(jnp.ones_like(vals), idx, num_segments=N)
        return s / jnp.maximum(c, 1.0)

    return scatter_mean(phi_i, i) + scatter_mean(phi_j, j)


def _init_params(key):
    """Deterministic param init. Layer sizes: [1+D] + n_hidden*[dim_hidden] + [1]."""
    k1, k2, k3 = jax.random.split(key, 3)
    w1 = jax.random.normal(k1, (FEAT_IN, DIM_HIDDEN), jnp.float32) * 0.3
    b1 = jnp.full((1, DIM_HIDDEN), 0.01, jnp.float32)
    w2 = jax.random.normal(k2, (DIM_HIDDEN, DIM_HIDDEN), jnp.float32) * 0.2
    b2 = jnp.full((1, DIM_HIDDEN), -0.01, jnp.float32)
    w3 = jax.random.normal(k3, (DIM_HIDDEN, 1), jnp.float32) * 0.2
    b3 = jnp.full((1, 1), 0.02, jnp.float32)
    return (w1, b1, w2, b2, w3, b3)


def _make_graph(kr, kv, ke, n_nodes, n_edges):
    r_ij = jax.random.normal(kr, (n_edges, D), jnp.float32)
    v = jax.random.normal(kv, (n_nodes, D), jnp.float32)
    edge_index = jax.random.randint(ke, (2, n_edges), 0, n_nodes, dtype=jnp.int32)
    return {"edge_index": edge_index, "r_ij": r_ij, "v": v}


if __name__ == "__main__":
    key = jax.random.PRNGKey(0)
    k_w, k_r1, k_v1, k_e1, k_r2, k_v2, k_e2 = jax.random.split(key, 7)
    params = _init_params(k_w)

    # Small graph (single tile in each grid axis).
    N1, E1 = 6, 12
    inputs1 = _make_graph(k_r1, k_v1, k_e1, N1, E1)
    out1 = cg_model_s_forward(inputs1, params)
    jax.block_until_ready(out1)
    ref1 = _reference_forward(inputs1, params)
    assert out1.shape == (N1, 1)
    assert jnp.allclose(out1, ref1, atol=2e-3, rtol=2e-3)

    # Larger graph with default (big) tiles: node padding, multiple node tiles.
    N2, E2 = 300, 2000
    inputs2 = _make_graph(k_r2, k_v2, k_e2, N2, E2)
    out2 = cg_model_s_forward(inputs2, params)
    jax.block_until_ready(out2)
    ref2 = _reference_forward(inputs2, params)
    assert out2.shape == (N2, 1)
    assert jnp.allclose(out2, ref2, atol=2e-3, rtol=2e-3)

    # Same graph with small tiles: exercises multi-edge-tile accumulation
    # (init / accumulate / finalize across the "arbitrary" edge axis).
    out3 = cg_model_s_forward(inputs2, params, edge_tile=512, node_tile=128)
    jax.block_until_ready(out3)
    assert jnp.allclose(out3, ref2, atol=2e-3, rtol=2e-3)

    print("KERNEL_OK")
</pallas_src>

<mosaic_0001>
module attributes {stable_mosaic.version = 11 : i64} {
  func.func @_edge_mlp_kernel(%arg0: i32, %arg1: memref<8x128xf32, #tpu.memory_space<vmem>>, %arg2: memref<32x8xf32, #tpu.memory_space<vmem>>, %arg3: memref<32x1xf32, #tpu.memory_space<vmem>>, %arg4: memref<32x32xf32, #tpu.memory_space<vmem>>, %arg5: memref<32x1xf32, #tpu.memory_space<vmem>>, %arg6: memref<32x128xf32, #tpu.memory_space<vmem>>, %arg7: memref<32x128xf32, #tpu.memory_space<vmem>>) attributes {dimension_semantics = [#tpu.dimension_semantics<parallel>], iteration_bounds = array<i64: 1>, scalar_prefetch = 0 : i64, scratch_operands = 0 : i64, tpu.core_type = #tpu.core_type<tc>, window_params = [{transform_indices = @transform_0, window_bounds = array<i64: 8, 128>}, {pipeline_mode = #tpu.pipeline_mode<synchronous>, transform_indices = @transform_1, window_bounds = array<i64: 32, 8>}, {pipeline_mode = #tpu.pipeline_mode<synchronous>, transform_indices = @transform_2, window_bounds = array<i64: 32, 1>}, {pipeline_mode = #tpu.pipeline_mode<synchronous>, transform_indices = @transform_3, window_bounds = array<i64: 32, 32>}, {pipeline_mode = #tpu.pipeline_mode<synchronous>, transform_indices = @transform_4, window_bounds = array<i64: 32, 1>}, {transform_indices = @transform_5, window_bounds = array<i64: 32, 128>}, {transform_indices = @transform_6, window_bounds = array<i64: 32, 128>}]} {
    %c0 = arith.constant 0 : index
    %c0_0 = arith.constant 0 : index
    %0 = vector.load %arg1[%c0, %c0_0] : memref<8x128xf32, #tpu.memory_space<vmem>>, vector<8x128xf32>
    %1 = tpu.iota {dimensions = array<i32: 0>} : vector<8x1xi32>
    %c1_i32 = arith.constant 1 : i32
    %2 = vector.broadcast %c1_i32 : i32 to vector<8x1xi32>
    %3 = arith.cmpi sge, %1, %2 : vector<8x1xi32>
    %c3_i32 = arith.constant 3 : i32
    %4 = vector.broadcast %c3_i32 : i32 to vector<8x1xi32>
    %5 = arith.cmpi sle, %1, %4 : vector<8x1xi32>
    %6 = arith.andi %3, %5 : vector<8x1xi1>
    %cst = arith.constant -1.000000e+00 : f32
    %cst_1 = arith.constant 1.000000e+00 : f32
    %7 = vector.broadcast %cst : f32 to vector<8x1xf32>
    %8 = vector.broadcast %cst_1 : f32 to vector<8x1xf32>
    %9 = arith.select %6, %7, %8 : vector<8x1xi1>, vector<8x1xf32>
    %c0_2 = arith.constant 0 : index
    %c0_3 = arith.constant 0 : index
    %10 = vector.load %arg2[%c0_2, %c0_3] : memref<32x8xf32, #tpu.memory_space<vmem>>, vector<32x8xf32>
    %cst_4 = arith.constant dense<0.000000e+00> : vector<32x128xf32>
    %11 = tpu.matmul %10, %0, %cst_4 {dimension_numbers = #tpu.dot_dimension_numbers<[1], [0], [0], [1], [0, 0, 1, 1], [], []>} : vector<32x8xf32>, vector<8x128xf32>, vector<32x128xf32> -> vector<32x128xf32>
    %c0_5 = arith.constant 0 : index
    %c0_6 = arith.constant 0 : index
    %12 = vector.load %arg3[%c0_5, %c0_6] : memref<32x1xf32, #tpu.memory_space<vmem>>, vector<32x1xf32>
    %13 = vector.broadcast %12 : vector<32x1xf32> to vector<32x128xf32>
    %14 = arith.addf %11, %13 : vector<32x128xf32>
    %15 = arith.negf %14 : vector<32x128xf32>
    %16 = math.exp %15 : vector<32x128xf32>
    %cst_7 = arith.constant 1.000000e+00 : f32
    %17 = vector.broadcast %cst_7 : f32 to vector<32x128xf32>
    %18 = arith.addf %17, %16 : vector<32x128xf32>
    %19 = arith.divf %17, %18 : vector<32x128xf32>
    %20 = arith.mulf %14, %19 : vector<32x128xf32>
    %c0_8 = arith.constant 0 : index
    %c0_9 = arith.constant 0 : index
    %21 = vector.load %arg4[%c0_8, %c0_9] : memref<32x32xf32, #tpu.memory_space<vmem>>, vector<32x32xf32>
    %cst_10 = arith.constant dense<0.000000e+00> : vector<32x128xf32>
    %22 = tpu.matmul %21, %20, %cst_10 {dimension_numbers = #tpu.dot_dimension_numbers<[1], [0], [0], [1], [0, 0, 1, 1], [], []>} : vector<32x32xf32>, vector<32x128xf32>, vector<32x128xf32> -> vector<32x128xf32>
    %c0_11 = arith.constant 0 : index
    %c0_12 = arith.constant 0 : index
    %23 = vector.load %arg5[%c0_11, %c0_12] : memref<32x1xf32, #tpu.memory_space<vmem>>, vector<32x1xf32>
    %24 = vector.broadcast %23 : vector<32x1xf32> to vector<32x128xf32>
    %25 = arith.addf %22, %24 : vector<32x128xf32>
    %26 = arith.negf %25 : vector<32x128xf32>
    %27 = math.exp %26 : vector<32x128xf32>
    %cst_13 = arith.constant 1.000000e+00 : f32
    %28 = vector.broadcast %cst_13 : f32 to vector<32x128xf32>
    %29 = arith.addf %28, %27 : vector<32x128xf32>
    %30 = arith.divf %28, %29 : vector<32x128xf32>
    %31 = arith.mulf %25, %30 : vector<32x128xf32>
    %c0_14 = arith.constant 0 : index
    %c0_15 = arith.constant 0 : index
    %32 = vector.load %arg6[%c0_14, %c0_15] : memref<32x128xf32, #tpu.memory_space<vmem>>, vector<32x128xf32>
    tpu.vector_store %arg6[%c0_14, %c0_15], %31 {strides = array<i32>} : memref<32x128xf32, #tpu.memory_space<vmem>>, vector<32x128xf32>,
    %33 = vector.broadcast %9 : vector<8x1xf32> to vector<8x128xf32>
    %34 = arith.mulf %0, %33 : vector<8x128xf32>
    %c0_16 = arith.constant 0 : index
    %c0_17 = arith.constant 0 : index
    %35 = vector.load %arg2[%c0_16, %c0_17] : memref<32x8xf32, #tpu.memory_space<vmem>>, vector<32x8xf32>
    %cst_18 = arith.constant dense<0.000000e+00> : vector<32x128xf32>
    %36 = tpu.matmul %35, %34, %cst_18 {dimension_numbers = #tpu.dot_dimension_numbers<[1], [0], [0], [1], [0, 0, 1, 1], [], []>} : vector<32x8xf32>, vector<8x128xf32>, vector<32x128xf32> -> vector<32x128xf32>
    %c0_19 = arith.constant 0 : index
    %c0_20 = arith.constant 0 : index
    %37 = vector.load %arg3[%c0_19, %c0_20] : memref<32x1xf32, #tpu.memory_space<vmem>>, vector<32x1xf32>
    %38 = vector.broadcast %37 : vector<32x1xf32> to vector<32x128xf32>
    %39 = arith.addf %36, %38 : vector<32x128xf32>
    %40 = arith.negf %39 : vector<32x128xf32>
    %41 = math.exp %40 : vector<32x128xf32>
    %cst_21 = arith.constant 1.000000e+00 : f32
    %42 = vector.broadcast %cst_21 : f32 to vector<32x128xf32>
    %43 = arith.addf %42, %41 : vector<32x128xf32>
    %44 = arith.divf %42, %43 : vector<32x128xf32>
    %45 = arith.mulf %39, %44 : vector<32x128xf32>
    %c0_22 = arith.constant 0 : index
    %c0_23 = arith.constant 0 : index
    %46 = vector.load %arg4[%c0_22, %c0_23] : memref<32x32xf32, #tpu.memory_space<vmem>>, vector<32x32xf32>
    %cst_24 = arith.constant dense<0.000000e+00> : vector<32x128xf32>
    %47 = tpu.matmul %46, %45, %cst_24 {dimension_numbers = #tpu.dot_dimension_numbers<[1], [0], [0], [1], [0, 0, 1, 1], [], []>} : vector<32x32xf32>, vector<32x128xf32>, vector<32x128xf32> -> vector<32x128xf32>
    %c0_25 = arith.constant 0 : index
    %c0_26 = arith.constant 0 : index
    %48 = vector.load %arg5[%c0_25, %c0_26] : memref<32x1xf32, #tpu.memory_space<vmem>>, vector<32x1xf32>
    %49 = vector.broadcast %48 : vector<32x1xf32> to vector<32x128xf32>
    %50 = arith.addf %47, %49 : vector<32x128xf32>
    %51 = arith.negf %50 : vector<32x128xf32>
    %52 = math.exp %51 : vector<32x128xf32>
    %cst_27 = arith.constant 1.000000e+00 : f32
    %53 = vector.broadcast %cst_27 : f32 to vector<32x128xf32>
    %54 = arith.addf %53, %52 : vector<32x128xf32>
    %55 = arith.divf %53, %54 : vector<32x128xf32>
    %56 = arith.mulf %50, %55 : vector<32x128xf32>
    %c0_28 = arith.constant 0 : index
    %c0_29 = arith.constant 0 : index
    %57 = vector.load %arg7[%c0_28, %c0_29] : memref<32x128xf32, #tpu.memory_space<vmem>>, vector<32x128xf32>
    tpu.vector_store %arg7[%c0_28, %c0_29], %56 {strides = array<i32>} : memref<32x128xf32, #tpu.memory_space<vmem>>, vector<32x128xf32>,
    return
  }
  func.func @transform_0(%arg0: i32) -> (i32, i32) {
    %c0_i32 = arith.constant 0 : i32
    %c0_i32_0 = arith.constant 0 : i32
    return %c0_i32, %arg0 : i32, i32
  }
  func.func @transform_1(%arg0: i32) -> (i32, i32) {
    %c0_i32 = arith.constant 0 : i32
    %c0_i32_0 = arith.constant 0 : i32
    %c0_i32_1 = arith.constant 0 : i32
    return %c0_i32, %c0_i32_0 : i32, i32
  }
  func.func @transform_2(%arg0: i32) -> (i32, i32) {
    %c0_i32 = arith.constant 0 : i32
    %c0_i32_0 = arith.constant 0 : i32
    %c0_i32_1 = arith.constant 0 : i32
    return %c0_i32, %c0_i32_0 : i32, i32
  }
  func.func @transform_3(%arg0: i32) -> (i32, i32) {
    %c0_i32 = arith.constant 0 : i32
    %c0_i32_0 = arith.constant 0 : i32
    %c0_i32_1 = arith.constant 0 : i32
    return %c0_i32, %c0_i32_0 : i32, i32
  }
  func.func @transform_4(%arg0: i32) -> (i32, i32) {
    %c0_i32 = arith.constant 0 : i32
    %c0_i32_0 = arith.constant 0 : i32
    %c0_i32_1 = arith.constant 0 : i32
    return %c0_i32, %c0_i32_0 : i32, i32
  }
  func.func @transform_5(%arg0: i32) -> (i32, i32) {
    %c0_i32 = arith.constant 0 : i32
    %c0_i32_0 = arith.constant 0 : i32
    return %c0_i32, %arg0 : i32, i32
  }
  func.func @transform_6(%arg0: i32) -> (i32, i32) {
    %c0_i32 = arith.constant 0 : i32
    %c0_i32_0 = arith.constant 0 : i32
    return %c0_i32, %arg0 : i32, i32
  }
}

</mosaic_0001>

<llo_original>
// kernel: tpu_custom_call.1
$region0: #{tpu_custom_call.1}
  #allocation0 [shape = 'u32[]', space=smem, size = 0x4, offset = 0x4, fixed_abs, tag = 'smem constant byte address 0x4 - core index']
  #allocation1 [shape = 'u32[144,128]{1,0:T(1,128)}', space=vmem, size = 0x12000, scoped, tag = 'internal scratch']
  %s0 = inlined_call_operand.vmem [shape: f32[8,128], index: 0, kind: input, shape index: {}]
  %s1 = inlined_call_operand.vmem [shape: f32[32,8], index: 1, kind: input, shape index: {}]
  %s2 = inlined_call_operand.vmem [shape: f32[32,1], index: 2, kind: input, shape index: {}]
  %s3 = inlined_call_operand.vmem [shape: f32[32,32], index: 3, kind: input, shape index: {}]
  %s4 = inlined_call_operand.vmem [shape: f32[32,1], index: 4, kind: input, shape index: {}]
  %s5 = inlined_call_operand.hbm [shape: f32[32,128], index: 5, kind: output, shape index: {0}]
  %s6 = inlined_call_operand.hbm [shape: f32[32,128], index: 6, kind: output, shape index: {1}]
  %7 = xla_tuple %s5, %s6
  %s8 = sld [smem:[#allocation0]]
  $region38: #{tpu_custom_call.1} parent=0
    _
  %s10 = ssub.s32 1, %s8
  %s11 = scalar_select 0, %s10, %s8
  $region1: #{tpu_custom_call.1} parent=0
    #allocation2 [shape = 'u8[16384]{0}', space=vmem, size = 0x4000, scoped, tag = 'output window, operand 0, single buffered']
    #allocation3 [shape = 's32[1]{0}', space=sflag, size = 0x4, scoped, tag = 'scoped memory for tpu_custom_call.1']
    #allocation4 [shape = 'u8[16384]{0}', space=vmem, size = 0x4000, scoped, tag = 'output window, operand 1, single buffered']
    #allocation5 [shape = 's32[1]{0}', space=sflag, size = 0x4, scoped, tag = 'scoped memory for tpu_custom_call.1']
    %12 = vsyncpa [#allocation3], 0
    %13 = vsyncpa [#allocation5], 0
    // Predicated region
    $region2: #{tpu_custom_call.1} parent=1 // pred_check
      _
    $region3: #{tpu_custom_call.1} parent=1 // pred_check_branch
      %15 = sbr.rel (0) target = $region5
    $region4: #{tpu_custom_call.1} parent=1 // pred_region
      _
    $region5: #{tpu_custom_call.1} parent=1 // pred_fallthru
      _
    // Predicated region
    $region6: #{tpu_custom_call.1} parent=1 // pred_check
      _
    $region7: #{tpu_custom_call.1} parent=1 // pred_check_branch
      %17 = sbr.rel (0) target = $region9
    $region8: #{tpu_custom_call.1} parent=1 // pred_region
      _
    $region9: #{tpu_custom_call.1} parent=1 // pred_fallthru
      _
    // Predicated region
    $region10: #{tpu_custom_call.1} parent=1 // pred_check
      _
    $region11: #{tpu_custom_call.1} parent=1 // pred_check_branch
      %19 = sbr.rel (0) target = $region13
    $region12: #{tpu_custom_call.1} parent=1 // pred_region
      _
    $region13: #{tpu_custom_call.1} parent=1 // pred_fallthru
      _
    // Predicated region
    $region14: #{tpu_custom_call.1} parent=1 // pred_check
      _
    $region15: #{tpu_custom_call.1} parent=1 // pred_check_branch
      %21 = sbr.rel (0) target = $region17
    $region16: #{tpu_custom_call.1} parent=1 // pred_region
      _
    $region17: #{tpu_custom_call.1} parent=1 // pred_fallthru
      _
    // Predicated region
    $region18: #{tpu_custom_call.1} parent=1 // pred_check
      _
    $region19: #{tpu_custom_call.1} parent=1 // pred_check_branch
      %23 = sbr.rel (0) target = $region21
    $region20: #{tpu_custom_call.1} parent=1 // pred_region
      _
    $region21: #{tpu_custom_call.1} parent=1 // pred_fallthru
      _
    %v24 = vld [vmem:[%s0] sm:$0xff]
    %v25 = vlaneseq
    %v26 = vshrl.u32 %v25, 7
    %vm27 = vcmp.ge.s32.totalorder %v26, 1
    %vm28 = vcmp.le.s32.totalorder %v26, 3
    %vm29 = vmand %vm27, %vm28
    %v30 = vsel %vm29, -1.0, 1.0
    %v31 = vld [vmem:[%s1] sm:$0xff]
    %v32 = vld [vmem:[%s1 + $0x8] sm:$0xff]
    %v33 = vld [vmem:[%s1 + $0x10] sm:$0xff]
    %v34 = vld [vmem:[%s1 + $0x18] sm:$0xff]
    %v35 = vld [vmem:[%s2] sm:$0xff]
    %v36 = vld [vmem:[%s2 + $0x8] sm:$0xff]
    %v37 = vld [vmem:[%s2 + $0x10] sm:$0xff]
    %v38 = vld [vmem:[%s2 + $0x18] sm:$0xff]
    %40 = vset.pattern.permute.xlu0 0
    %41 = vperm.xlu0 %40, %v35
    %v42 = vpop.permute.xlu0 %41
    %45 = vset.pattern.permute.xlu0 0
    %46 = vperm.xlu0 %45, %v36
    %v47 = vpop.permute.xlu0 %46
    %50 = vset.pattern.permute.xlu0 0
    %51 = vperm.xlu0 %50, %v37
    %v52 = vpop.permute.xlu0 %51
    %55 = vset.pattern.permute.xlu0 0
    %56 = vperm.xlu0 %55, %v38
    %v57 = vpop.permute.xlu0 %56
    %vm59 = vcmask 64512
    %v61 = vsel %vm59, %v31, 0
    %v64 = vsel %vm59, %v32, 0
    %v67 = vsel %vm59, %v33, 0
    %v70 = vsel %vm59, %v34, 0
    %72 = vmatprep.subr.mxu0 0.0
    %73 = vmatpush1.msra.mxu0 0.0
    %74 = vmatprep.subr.mxu0 0.0
    %75 = vmatpush1.msra.mxu0 0.0
    %76 = vmatprep.subr.mxu0 0.0
    %77 = vmatpush1.msra.mxu0 0.0
    %78 = vmatprep.subr.mxu0 0.0
    %79 = vmatpush1.msra.mxu0 0.0
    %80 = vmatprep.subr.mxu0 0.0
    %81 = vmatpush1.msra.mxu0 0.0
    %82 = vmatprep.subr.mxu0 0.0
    %83 = vmatpush1.msra.mxu0 0.0
    %84 = vmatprep.subr.mxu0 0.0
    %85 = vmatpush1.msra.mxu0 0.0
    %86 = vmatprep.subr.mxu0 0.0
    %87 = vmatpush1.msra.mxu0 0.0
    %88 = vmatprep.subr.mxu0 0.0
    %89 = vmatpush1.msra.mxu0 0.0
    %90 = vmatprep.subr.mxu0 0.0
    %91 = vmatpush1.msra.mxu0 0.0
    %92 = vmatprep.subr.mxu0 0.0
    %93 = vmatpush1.msra.mxu0 0.0
    %94 = vmatprep.subr.mxu0 0.0
    %95 = vmatpush1.msra.mxu0 0.0
    %96 = vmatprep.subr.mxu0 0.0
    %97 = vmatpush1.msra.mxu0 0.0
    %98 = vmatprep.subr.mxu0 0.0
    %99 = vmatpush1.msra.mxu0 0.0
    %100 = vmatprep.subr.mxu0 0.0
    %101 = vmatpush1.msra.mxu0 0.0
    %102 = vmatprep.subr.mxu0 0.0
    %103 = vmatpush1.msra.mxu0 %v24
    %104 = vmatprep.subr.mxu0 0.0
    %105 = vmatpush2.msra.mxu0 0.0
    %106 = vmatprep.subr.mxu0 0.0
    %107 = vmatpush2.msra.mxu0 0.0
    %108 = vmatprep.subr.mxu0 0.0
    %109 = vmatpush2.msra.mxu0 0.0
    %110 = vmatprep.subr.mxu0 0.0
    %111 = vmatpush2.msra.mxu0 0.0
    %112 = vmatprep.subr.mxu0 0.0
    %113 = vmatpush2.msra.mxu0 0.0
    %114 = vmatprep.subr.mxu0 0.0
    %115 = vmatpush2.msra.mxu0 0.0
    %116 = vmatprep.subr.mxu0 0.0
    %117 = vmatpush2.msra.mxu0 0.0
    %118 = vmatprep.subr.mxu0 0.0
    %119 = vmatpush2.msra.mxu0 0.0
    %120 = vmatprep.subr.mxu0 0.0
    %121 = vmatpush2.msra.mxu0 0.0
    %122 = vmatprep.subr.mxu0 0.0
    %123 = vmatpush2.msra.mxu0 0.0
    %124 = vmatprep.subr.mxu0 0.0
    %125 = vmatpush2.msra.mxu0 0.0
    %126 = vmatprep.subr.mxu0 0.0
    %127 = vmatpush2.msra.mxu0 0.0
    %128 = vmatprep.subr.mxu0 0.0
    %129 = vmatpush2.msra.mxu0 0.0
    %130 = vmatprep.subr.mxu0 0.0
    %131 = vmatpush2.msra.mxu0 0.0
    %132 = vmatprep.subr.mxu0 0.0
    %133 = vmatpush2.msra.mxu0 0.0
    %134 = vmatprep.subr.mxu0 0.0
    %135 = vmatpush2.msra.mxu0 0.0
    %136 = vmatprep.mubr.f32.mxu0 0.0
    %137 = vmatmul.mubr.f32.gmra.mxu0 %v61
    %v138 = vpop.f32.mrf.mxu0
    %v139 = vadd.f32 %v42, %v138
    %v140 = vpop.f32.mrf.mxu0
    %141 = vmatprep.mubr.f32.mxu0 0.0
    %142 = vmatmul.mubr.f32.gmra.mxu0 %v64
    %v143 = vpop.f32.mrf.mxu0
    %v144 = vadd.f32 %v47, %v143
    %v145 = vpop.f32.mrf.mxu0
    %146 = vmatprep.mubr.f32.mxu0 0.0
    %147 = vmatmul.mubr.f32.gmra.mxu0 %v67
    %v148 = vpop.f32.mrf.mxu0
    %v149 = vadd.f32 %v52, %v148
    %v150 = vpop.f32.mrf.mxu0
    %151 = vmatprep.mubr.f32.mxu0 0.0
    %152 = vmatmul.mubr.f32.gmra.mxu0 %v70
    %v153 = vpop.f32.mrf.mxu0
    %v154 = vadd.f32 %v57, %v153
    %v155 = vpop.f32.mrf.mxu0
    %156 = vdwg.mxu0
    %v157 = vxor.u32 %v139, 2147483648
    %v158 = vxor.u32 %v144, 2147483648
    %v159 = vxor.u32 %v149, 2147483648
    %v160 = vxor.u32 %v154, 2147483648
    %v161 = vmul.f32 %v157, 1.442695
    %v162 = vpow.pop %v161
    %v163 = vmul.f32 %v158, 1.442695
    %v164 = vpow.pop %v163
    %v165 = vmul.f32 %v159, 1.442695
    %v166 = vpow.pop %v165
    %v167 = vmul.f32 %v160, 1.442695
    %v168 = vpow.pop %v167
    %v169 = vadd.f32 %v162, 1.0
    %v170 = vadd.f32 %v164, 1.0
    %v171 = vadd.f32 %v166, 1.0
    %v172 = vadd.f32 %v168, 1.0
    %v173 = vrcp.pop %v169
    %v174 = vmul.f32 1.0, %v173
    %v175 = vrcp.pop %v170
    %v176 = vmul.f32 1.0, %v175
    %v177 = vrcp.pop %v171
    %v178 = vmul.f32 1.0, %v177
    %v179 = vrcp.pop %v172
    %v180 = vmul.f32 1.0, %v179
    %v181 = vmul.f32 %v139, %v174
    %v182 = vmul.f32 %v144, %v176
    %v183 = vmul.f32 %v149, %v178
    %v184 = vmul.f32 %v154, %v180
    %v185 = vld [vmem:[%s3] sm:$0xff]
    %v186 = vld [vmem:[%s3 + $0x8] sm:$0xff]
    %v187 = vld [vmem:[%s3 + $0x10] sm:$0xff]
    %v188 = vld [vmem:[%s3 + $0x18] sm:$0xff]
    %v189 = vld [vmem:[%s4] sm:$0xff]
    %v190 = vld [vmem:[%s4 + $0x8] sm:$0xff]
    %v191 = vld [vmem:[%s4 + $0x10] sm:$0xff]
    %v192 = vld [vmem:[%s4 + $0x18] sm:$0xff]
    %194 = vset.pattern.permute.xlu0 0
    %195 = vperm.xlu0 %194, %v189
    %v196 = vpop.permute.xlu0 %195
    %199 = vset.pattern.permute.xlu0 0
    %200 = vperm.xlu0 %199, %v190
    %v201 = vpop.permute.xlu0 %200
    %204 = vset.pattern.permute.xlu0 0
    %205 = vperm.xlu0 %204, %v191
    %v206 = vpop.permute.xlu0 %205
    %209 = vset.pattern.permute.xlu0 0
    %210 = vperm.xlu0 %209, %v192
    %v211 = vpop.permute.xlu0 %210
    %vm213 = vcmask 261120
    %v215 = vsel %vm213, %v185, 0
    %v218 = vsel %vm213, %v186, 0
    %v221 = vsel %vm213, %v187, 0
    %v224 = vsel %vm213, %v188, 0
    %226 = vmatprep.subr.mxu0 0.0
    %227 = vmatpush1.msra.mxu0 0.0
    %228 = vmatprep.subr.mxu0 0.0
    %229 = vmatpush1.msra.mxu0 0.0
    %230 = vmatprep.subr.mxu0 0.0
    %231 = vmatpush1.msra.mxu0 0.0
    %232 = vmatprep.subr.mxu0 0.0
    %233 = vmatpush1.msra.mxu0 0.0
    %234 = vmatprep.subr.mxu0 0.0
    %235 = vmatpush1.msra.mxu0 0.0
    %236 = vmatprep.subr.mxu0 0.0
    %237 = vmatpush1.msra.mxu0 0.0
    %238 = vmatprep.subr.mxu0 0.0
    %239 = vmatpush1.msra.mxu0 0.0
    %240 = vmatprep.subr.mxu0 0.0
    %241 = vmatpush1.msra.mxu0 0.0
    %242 = vmatprep.subr.mxu0 0.0
    %243 = vmatpush1.msra.mxu0 0.0
    %244 = vmatprep.subr.mxu0 0.0
    %245 = vmatpush1.msra.mxu0 0.0
    %246 = vmatprep.subr.mxu0 0.0
    %247 = vmatpush1.msra.mxu0 0.0
    %248 = vmatprep.subr.mxu0 0.0
    %249 = vmatpush1.msra.mxu0 0.0
    %250 = vmatprep.subr.mxu0 0.0
    %251 = vmatpush1.msra.mxu0 %v184
    %252 = vmatprep.subr.mxu0 0.0
    %253 = vmatpush1.msra.mxu0 %v183
    %254 = vmatprep.subr.mxu0 0.0
    %255 = vmatpush1.msra.mxu0 %v182
    %256 = vmatprep.subr.mxu0 0.0
    %257 = vmatpush1.msra.mxu0 %v181
    %258 = vmatprep.subr.mxu0 0.0
    %259 = vmatpush2.msra.mxu0 0.0
    %260 = vmatprep.subr.mxu0 0.0
    %261 = vmatpush2.msra.mxu0 0.0
    %262 = vmatprep.subr.mxu0 0.0
    %263 = vmatpush2.msra.mxu0 0.0
    %264 = vmatprep.subr.mxu0 0.0
    %265 = vmatpush2.msra.mxu0 0.0
    %266 = vmatprep.subr.mxu0 0.0
    %267 = vmatpush2.msra.mxu0 0.0
    %268 = vmatprep.subr.mxu0 0.0
    %269 = vmatpush2.msra.mxu0 0.0
    %270 = vmatprep.subr.mxu0 0.0
    %271 = vmatpush2.msra.mxu0 0.0
    %272 = vmatprep.subr.mxu0 0.0
    %273 = vmatpush2.msra.mxu0 0.0
    %274 = vmatprep.subr.mxu0 0.0
    %275 = vmatpush2.msra.mxu0 0.0
    %276 = vmatprep.subr.mxu0 0.0
    %277 = vmatpush2.msra.mxu0 0.0
    %278 = vmatprep.subr.mxu0 0.0
    %279 = vmatpush2.msra.mxu0 0.0
    %280 = vmatprep.subr.mxu0 0.0
    %281 = vmatpush2.msra.mxu0 0.0
    %282 = vmatprep.subr.mxu0 0.0
    %283 = vmatpush2.msra.mxu0 0.0
    %284 = vmatprep.subr.mxu0 0.0
    %285 = vmatpush2.msra.mxu0 0.0
    %286 = vmatprep.subr.mxu0 0.0
    %287 = vmatpush2.msra.mxu0 0.0
    %288 = vmatprep.subr.mxu0 0.0
    %289 = vmatpush2.msra.mxu0 0.0
    %290 = vmatprep.mubr.f32.mxu0 0.0
    %291 = vmatmul.mubr.f32.gmra.mxu0 %v215
    %v292 = vpop.f32.mrf.mxu0
    %v293 = vadd.f32 %v196, %v292
    %v294 = vpop.f32.mrf.mxu0
    %295 = vmatprep.mubr.f32.mxu0 0.0
    %296 = vmatmul.mubr.f32.gmra.mxu0 %v218
    %v297 = vpop.f32.mrf.mxu0
    %v298 = vadd.f32 %v201, %v297
    %v299 = vpop.f32.mrf.mxu0
    %300 = vmatprep.mubr.f32.mxu0 0.0
    %301 = vmatmul.mubr.f32.gmra.mxu0 %v221
    %v302 = vpop.f32.mrf.mxu0
    %v303 = vadd.f32 %v206, %v302
    %v304 = vpop.f32.mrf.mxu0
    %305 = vmatprep.mubr.f32.mxu0 0.0
    %306 = vmatmul.mubr.f32.gmra.mxu0 %v224
    %v307 = vpop.f32.mrf.mxu0
    %v308 = vadd.f32 %v211, %v307
    %v309 = vpop.f32.mrf.mxu0
    %310 = vdwg.mxu0
    %v311 = vxor.u32 %v293, 2147483648
    %v312 = vxor.u32 %v298, 2147483648
    %v313 = vxor.u32 %v303, 2147483648
    %v314 = vxor.u32 %v308, 2147483648
    %v315 = vmul.f32 %v311, 1.442695
    %v316 = vpow.pop %v315
    %v317 = vmul.f32 %v312, 1.442695
    %v318 = vpow.pop %v317
    %v319 = vmul.f32 %v313, 1.442695
    %v320 = vpow.pop %v319
    %v321 = vmul.f32 %v314, 1.442695
    %v322 = vpow.pop %v321
    %v323 = vadd.f32 %v316, 1.0
    %v324 = vadd.f32 %v318, 1.0
    %v325 = vadd.f32 %v320, 1.0
    %v326 = vadd.f32 %v322, 1.0
    %v327 = vrcp.pop %v323
    %v328 = vmul.f32 1.0, %v327
    %v329 = vrcp.pop %v324
    %v330 = vmul.f32 1.0, %v329
    %v331 = vrcp.pop %v325
    %v332 = vmul.f32 1.0, %v331
    %v333 = vrcp.pop %v326
    %v334 = vmul.f32 1.0, %v333
    %v335 = vmul.f32 %v293, %v328
    %v336 = vmul.f32 %v298, %v330
    %v337 = vmul.f32 %v303, %v332
    %v338 = vmul.f32 %v308, %v334
    %339 = vst [vmem:[#allocation2] sm:$0xff] %v335
    %340 = vst [vmem:[#allocation2 + $0x8] sm:$0xff] %v336
    %341 = vst [vmem:[#allocation2 + $0x10] sm:$0xff] %v337
    %342 = vst [vmem:[#allocation2 + $0x18] sm:$0xff] %v338
    %v343 = vmul.f32 %v24, %v30
    %v344 = vld [vmem:[%s1] sm:$0xff]
    %v345 = vld [vmem:[%s1 + $0x8] sm:$0xff]
    %v346 = vld [vmem:[%s1 + $0x10] sm:$0xff]
    %v347 = vld [vmem:[%s1 + $0x18] sm:$0xff]
    %v348 = vld [vmem:[%s2] sm:$0xff]
    %v349 = vld [vmem:[%s2 + $0x8] sm:$0xff]
    %v350 = vld [vmem:[%s2 + $0x10] sm:$0xff]
    %v351 = vld [vmem:[%s2 + $0x18] sm:$0xff]
    %353 = vset.pattern.permute.xlu0 0
    %354 = vperm.xlu0 %353, %v348
    %v355 = vpop.permute.xlu0 %354
    %358 = vset.pattern.permute.xlu0 0
    %359 = vperm.xlu0 %358, %v349
    %v360 = vpop.permute.xlu0 %359
    %363 = vset.pattern.permute.xlu0 0
    %364 = vperm.xlu0 %363, %v350
    %v365 = vpop.permute.xlu0 %364
    %368 = vset.pattern.permute.xlu0 0
    %369 = vperm.xlu0 %368, %v351
    %v370 = vpop.permute.xlu0 %369
    %v373 = vsel %vm59, %v344, 0
    %v376 = vsel %vm59, %v345, 0
    %v379 = vsel %vm59, %v346, 0
    %v382 = vsel %vm59, %v347, 0
    %384 = vmatprep.subr.mxu0 0.0
    %385 = vmatpush1.msra.mxu0 0.0
    %386 = vmatprep.subr.mxu0 0.0
    %387 = vmatpush1.msra.mxu0 0.0
    %388 = vmatprep.subr.mxu0 0.0
    %389 = vmatpush1.msra.mxu0 0.0
    %390 = vmatprep.subr.mxu0 0.0
    %391 = vmatpush1.msra.mxu0 0.0
    %392 = vmatprep.subr.mxu0 0.0
    %393 = vmatpush1.msra.mxu0 0.0
    %394 = vmatprep.subr.mxu0 0.0
    %395 = vmatpush1.msra.mxu0 0.0
    %396 = vmatprep.subr.mxu0 0.0
    %397 = vmatpush1.msra.mxu0 0.0
    %398 = vmatprep.subr.mxu0 0.0
    %399 = vmatpush1.msra.mxu0 0.0
    %400 = vmatprep.subr.mxu0 0.0
    %401 = vmatpush1.msra.mxu0 0.0
    %402 = vmatprep.subr.mxu0 0.0
    %403 = vmatpush1.msra.mxu0 0.0
    %404 = vmatprep.subr.mxu0 0.0
    %405 = vmatpush1.msra.mxu0 0.0
    %406 = vmatprep.subr.mxu0 0.0
    %407 = vmatpush1.msra.mxu0 0.0
    %408 = vmatprep.subr.mxu0 0.0
    %409 = vmatpush1.msra.mxu0 0.0
    %410 = vmatprep.subr.mxu0 0.0
    %411 = vmatpush1.msra.mxu0 0.0
    %412 = vmatprep.subr.mxu0 0.0
    %413 = vmatpush1.msra.mxu0 0.0
    %414 = vmatprep.subr.mxu0 0.0
    %415 = vmatpush1.msra.mxu0 %v343
    %416 = vmatprep.subr.mxu0 0.0
    %417 = vmatpush2.msra.mxu0 0.0
    %418 = vmatprep.subr.mxu0 0.0
    %419 = vmatpush2.msra.mxu0 0.0
    %420 = vmatprep.subr.mxu0 0.0
    %421 = vmatpush2.msra.mxu0 0.0
    %422 = vmatprep.subr.mxu0 0.0
    %423 = vmatpush2.msra.mxu0 0.0
    %424 = vmatprep.subr.mxu0 0.0
    %425 = vmatpush2.msra.mxu0 0.0
    %426 = vmatprep.subr.mxu0 0.0
    %427 = vmatpush2.msra.mxu0 0.0
    %428 = vmatprep.subr.mxu0 0.0
    %429 = vmatpush2.msra.mxu0 0.0
    %430 = vmatprep.subr.mxu0 0.0
    %431 = vmatpush2.msra.mxu0 0.0
    %432 = vmatprep.subr.mxu0 0.0
    %433 = vmatpush2.msra.mxu0 0.0
    %434 = vmatprep.subr.mxu0 0.0
    %435 = vmatpush2.msra.mxu0 0.0
    %436 = vmatprep.subr.mxu0 0.0
    %437 = vmatpush2.msra.mxu0 0.0
    %438 = vmatprep.subr.mxu0 0.0
    %439 = vmatpush2.msra.mxu0 0.0
    %440 = vmatprep.subr.mxu0 0.0
    %441 = vmatpush2.msra.mxu0 0.0
    %442 = vmatprep.subr.mxu0 0.0
    %443 = vmatpush2.msra.mxu0 0.0
    %444 = vmatprep.subr.mxu0 0.0
    %445 = vmatpush2.msra.mxu0 0.0
    %446 = vmatprep.subr.mxu0 0.0
    %447 = vmatpush2.msra.mxu0 0.0
    %448 = vmatprep.mubr.f32.mxu0 0.0
    %449 = vmatmul.mubr.f32.gmra.mxu0 %v373
    %v450 = vpop.f32.mrf.mxu0
    %v451 = vadd.f32 %v355, %v450
    %v452 = vpop.f32.mrf.mxu0
    %453 = vmatprep.mubr.f32.mxu0 0.0
    %454 = vmatmul.mubr.f32.gmra.mxu0 %v376
    %v455 = vpop.f32.mrf.mxu0
    %v456 = vadd.f32 %v360, %v455
    %v457 = vpop.f32.mrf.mxu0
    %458 = vmatprep.mubr.f32.mxu0 0.0
    %459 = vmatmul.mubr.f32.gmra.mxu0 %v379
    %v460 = vpop.f32.mrf.mxu0
    %v461 = vadd.f32 %v365, %v460
    %v462 = vpop.f32.mrf.mxu0
    %463 = vmatprep.mubr.f32.mxu0 0.0
    %464 = vmatmul.mubr.f32.gmra.mxu0 %v382
    %v465 = vpop.f32.mrf.mxu0
    %v466 = vadd.f32 %v370, %v465
    %v467 = vpop.f32.mrf.mxu0
    %468 = vdwg.mxu0
    %v469 = vxor.u32 %v451, 2147483648
    %v470 = vxor.u32 %v456, 2147483648
    %v471 = vxor.u32 %v461, 2147483648
    %v472 = vxor.u32 %v466, 2147483648
    %v473 = vmul.f32 %v469, 1.442695
    %v474 = vpow.pop %v473
    %v475 = vmul.f32 %v470, 1.442695
    %v476 = vpow.pop %v475
    %v477 = vmul.f32 %v471, 1.442695
    %v478 = vpow.pop %v477
    %v479 = vmul.f32 %v472, 1.442695
    %v480 = vpow.pop %v479
    %v481 = vadd.f32 %v474, 1.0
    %v482 = vadd.f32 %v476, 1.0
    %v483 = vadd.f32 %v478, 1.0
    %v484 = vadd.f32 %v480, 1.0
    %v485 = vrcp.pop %v481
    %v486 = vmul.f32 1.0, %v485
    %v487 = vrcp.pop %v482
    %v488 = vmul.f32 1.0, %v487
    %v489 = vrcp.pop %v483
    %v490 = vmul.f32 1.0, %v489
    %v491 = vrcp.pop %v484
    %v492 = vmul.f32 1.0, %v491
    %v493 = vmul.f32 %v451, %v486
    %v494 = vmul.f32 %v456, %v488
    %v495 = vmul.f32 %v461, %v490
    %v496 = vmul.f32 %v466, %v492
    %v497 = vld [vmem:[%s3] sm:$0xff]
    %v498 = vld [vmem:[%s3 + $0x8] sm:$0xff]
    %v499 = vld [vmem:[%s3 + $0x10] sm:$0xff]
    %v500 = vld [vmem:[%s3 + $0x18] sm:$0xff]
    %v501 = vld [vmem:[%s4] sm:$0xff]
    %v502 = vld [vmem:[%s4 + $0x8] sm:$0xff]
    %v503 = vld [vmem:[%s4 + $0x10] sm:$0xff]
    %v504 = vld [vmem:[%s4 + $0x18] sm:$0xff]
    %506 = vset.pattern.permute.xlu0 0
    %507 = vperm.xlu0 %506, %v501
    %v508 = vpop.permute.xlu0 %507
    %511 = vset.pattern.permute.xlu0 0
    %512 = vperm.xlu0 %511, %v502
    %v513 = vpop.permute.xlu0 %512
    %516 = vset.pattern.permute.xlu0 0
    %517 = vperm.xlu0 %516, %v503
    %v518 = vpop.permute.xlu0 %517
    %521 = vset.pattern.permute.xlu0 0
    %522 = vperm.xlu0 %521, %v504
    %v523 = vpop.permute.xlu0 %522
    %v526 = vsel %vm213, %v497, 0
    %v529 = vsel %vm213, %v498, 0
    %v532 = vsel %vm213, %v499, 0
    %v535 = vsel %vm213, %v500, 0
    %537 = vmatprep.subr.mxu0 0.0
    %538 = vmatpush1.msra.mxu0 0.0
    %539 = vmatprep.subr.mxu0 0.0
    %540 = vmatpush1.msra.mxu0 0.0
    %541 = vmatprep.subr.mxu0 0.0
    %542 = vmatpush1.msra.mxu0 0.0
    %543 = vmatprep.subr.mxu0 0.0
    %544 = vmatpush1.msra.mxu0 0.0
    %545 = vmatprep.subr.mxu0 0.0
    %546 = vmatpush1.msra.mxu0 0.0
    %547 = vmatprep.subr.mxu0 0.0
    %548 = vmatpush1.msra.mxu0 0.0
    %549 = vmatprep.subr.mxu0 0.0
    %550 = vmatpush1.msra.mxu0 0.0
    %551 = vmatprep.subr.mxu0 0.0
    %552 = vmatpush1.msra.mxu0 0.0
    %553 = vmatprep.subr.mxu0 0.0
    %554 = vmatpush1.msra.mxu0 0.0
    %555 = vmatprep.subr.mxu0 0.0
    %556 = vmatpush1.msra.mxu0 0.0
    %557 = vmatprep.subr.mxu0 0.0
    %558 = vmatpush1.msra.mxu0 0.0
    %559 = vmatprep.subr.mxu0 0.0
    %560 = vmatpush1.msra.mxu0 0.0
    %561 = vmatprep.subr.mxu0 0.0
    %562 = vmatpush1.msra.mxu0 %v496
    %563 = vmatprep.subr.mxu0 0.0
    %564 = vmatpush1.msra.mxu0 %v495
    %565 = vmatprep.subr.mxu0 0.0
    %566 = vmatpush1.msra.mxu0 %v494
    %567 = vmatprep.subr.mxu0 0.0
    %568 = vmatpush1.msra.mxu0 %v493
    %569 = vmatprep.subr.mxu0 0.0
    %570 = vmatpush2.msra.mxu0 0.0
    %571 = vmatprep.subr.mxu0 0.0
    %572 = vmatpush2.msra.mxu0 0.0
    %573 = vmatprep.subr.mxu0 0.0
    %574 = vmatpush2.msra.mxu0 0.0
    %575 = vmatprep.subr.mxu0 0.0
    %576 = vmatpush2.msra.mxu0 0.0
    %577 = vmatprep.subr.mxu0 0.0
    %578 = vmatpush2.msra.mxu0 0.0
    %579 = vmatprep.subr.mxu0 0.0
    %580 = vmatpush2.msra.mxu0 0.0
    %581 = vmatprep.subr.mxu0 0.0
    %582 = vmatpush2.msra.mxu0 0.0
    %583 = vmatprep.subr.mxu0 0.0
    %584 = vmatpush2.msra.mxu0 0.0
    %585 = vmatprep.subr.mxu0 0.0
    %586 = vmatpush2.msra.mxu0 0.0
    %587 = vmatprep.subr.mxu0 0.0
    %588 = vmatpush2.msra.mxu0 0.0
    %589 = vmatprep.subr.mxu0 0.0
    %590 = vmatpush2.msra.mxu0 0.0
    %591 = vmatprep.subr.mxu0 0.0
    %592 = vmatpush2.msra.mxu0 0.0
    %593 = vmatprep.subr.mxu0 0.0
    %594 = vmatpush2.msra.mxu0 0.0
    %595 = vmatprep.subr.mxu0 0.0
    %596 = vmatpush2.msra.mxu0 0.0
    %597 = vmatprep.subr.mxu0 0.0
    %598 = vmatpush2.msra.mxu0 0.0
    %599 = vmatprep.subr.mxu0 0.0
    %600 = vmatpush2.msra.mxu0 0.0
    %601 = vmatprep.mubr.f32.mxu0 0.0
    %602 = vmatmul.mubr.f32.gmra.mxu0 %v526
    %v603 = vpop.f32.mrf.mxu0
    %v604 = vadd.f32 %v508, %v603
    %v605 = vpop.f32.mrf.mxu0
    %606 = vmatprep.mubr.f32.mxu0 0.0
    %607 = vmatmul.mubr.f32.gmra.mxu0 %v529
    %v608 = vpop.f32.mrf.mxu0
    %v609 = vadd.f32 %v513, %v608
    %v610 = vpop.f32.mrf.mxu0
    %611 = vmatprep.mubr.f32.mxu0 0.0
    %612 = vmatmul.mubr.f32.gmra.mxu0 %v532
    %v613 = vpop.f32.mrf.mxu0
    %v614 = vadd.f32 %v518, %v613
    %v615 = vpop.f32.mrf.mxu0
    %616 = vmatprep.mubr.f32.mxu0 0.0
    %617 = vmatmul.mubr.f32.gmra.mxu0 %v535
    %v618 = vpop.f32.mrf.mxu0
    %v619 = vadd.f32 %v523, %v618
    %v620 = vpop.f32.mrf.mxu0
    %621 = vdwg.mxu0
    %v622 = vxor.u32 %v604, 2147483648
    %v623 = vxor.u32 %v609, 2147483648
    %v624 = vxor.u32 %v614, 2147483648
    %v625 = vxor.u32 %v619, 2147483648
    %v626 = vmul.f32 %v622, 1.442695
    %v627 = vpow.pop %v626
    %v628 = vmul.f32 %v623, 1.442695
    %v629 = vpow.pop %v628
    %v630 = vmul.f32 %v624, 1.442695
    %v631 = vpow.pop %v630
    %v632 = vmul.f32 %v625, 1.442695
    %v633 = vpow.pop %v632
    %v634 = vadd.f32 %v627, 1.0
    %v635 = vadd.f32 %v629, 1.0
    %v636 = vadd.f32 %v631, 1.0
    %v637 = vadd.f32 %v633, 1.0
    %v638 = vrcp.pop %v634
    %v639 = vmul.f32 1.0, %v638
    %v640 = vrcp.pop %v635
    %v641 = vmul.f32 1.0, %v640
    %v642 = vrcp.pop %v636
    %v643 = vmul.f32 1.0, %v642
    %v644 = vrcp.pop %v637
    %v645 = vmul.f32 1.0, %v644
    %v646 = vmul.f32 %v604, %v639
    %v647 = vmul.f32 %v609, %v641
    %v648 = vmul.f32 %v614, %v643
    %v649 = vmul.f32 %v619, %v645
    %650 = vst [vmem:[#allocation4] sm:$0xff] %v646
    %651 = vst [vmem:[#allocation4 + $0x8] sm:$0xff] %v647
    %652 = vst [vmem:[#allocation4 + $0x10] sm:$0xff] %v648
    %653 = vst [vmem:[#allocation4 + $0x18] sm:$0xff] %v649
    // Predicated region
    $region22: #{tpu_custom_call.1} parent=1 // pred_check
      _
    $region23: #{tpu_custom_call.1} parent=1 // pred_check_branch
      %655 = sbr.rel (0) target = $region25
    $region24: #{tpu_custom_call.1} parent=1 // pred_region
      %s657 = ssub.s32 512, 512
      %658 = vsyncadd [#allocation3], %s657
      %s659 = sshll.u32 [#allocation2], 4
      %s660 = int_to_ptr.vmem [resolvable:$true] %s659
      %665 = dma.vmem_to_hbm [thread:$0]  %s660, 512, %s5, [#allocation3], 128, 128, 8
    $region25: #{tpu_custom_call.1} parent=1 // pred_fallthru
      _
    // Predicated region
    $region26: #{tpu_custom_call.1} parent=1 // pred_check
      _
    $region27: #{tpu_custom_call.1} parent=1 // pred_check_branch
      %667 = sbr.rel (0) target = $region29
    $region28: #{tpu_custom_call.1} parent=1 // pred_region
      %s669 = ssub.s32 512, 512
      %670 = vsyncadd [#allocation5], %s669
      %s671 = sshll.u32 [#allocation4], 4
      %s672 = int_to_ptr.vmem [resolvable:$true] %s671
      %677 = dma.vmem_to_hbm [thread:$0]  %s672, 512, %s6, [#allocation5], 128, 128, 8
    $region29: #{tpu_custom_call.1} parent=1 // pred_fallthru
      _
    // Predicated region
    $region30: #{tpu_custom_call.1} parent=1 // pred_check
      _
    $region31: #{tpu_custom_call.1} parent=1 // pred_check_branch
      %679 = sbr.rel (0) target = $region33
    $region32: #{tpu_custom_call.1} parent=1 // pred_region
      %680 = dma.done [#allocation3], 512
    $region33: #{tpu_custom_call.1} parent=1 // pred_fallthru
      _
    // Predicated region
    $region34: #{tpu_custom_call.1} parent=1 // pred_check
      _
    $region35: #{tpu_custom_call.1} parent=1 // pred_check_branch
      %682 = sbr.rel (0) target = $region37
    $region36: #{tpu_custom_call.1} parent=1 // pred_region
      %683 = dma.done [#allocation5], 512
    $region37: #{tpu_custom_call.1} parent=1 // pred_fallthru
      _
    %684 = vsyncpa [#allocation3], 1
    %685 = vsyncpa [#allocation5], 1

</llo_original>
